<compile_context>
chip_gen: v7x
topology: tpu7x:2x2x1
jax: 0.10.0
libtpu: 0.0.40
codegen_flags: <defaults>
</compile_context>

<pallas_src>
import functools

import jax
import jax.numpy as jnp
from jax import lax
from jax.experimental import pallas as pl
from jax.experimental.pallas import tpu as pltpu

EPS = 1e-5


def _resblock_kernel(x_ref, w1_ref, w2_ref, col_ref, o_ref, *, W):
    # x_ref: (C, HW) lane-dense -- one batch element (batch squeezed by BlockSpec)
    x = x_ref[...].astype(jnp.float32)
    C, HW = x.shape

    # Precomputed column-index row (1, HW); masks hoisted once, reused by both convs.
    wcol = col_ref[...]
    is_w0 = jnp.broadcast_to(wcol == 0, (C, HW))       # w == 0
    is_wl = jnp.broadcast_to(wcol == W - 1, (C, HW))   # w == W-1
    ones_row = jnp.ones((1, HW), jnp.float32)

    def cyc(y, k):
        # circular shift along the flat HW lane axis: out[:, p] = y[:, (p + k) % HW]
        k = k % HW
        if k == 0:
            return y
        return jnp.concatenate([y[:, k:], y[:, :k]], axis=1)

    def hshift(y, oh):
        # out[:, h*W + w] = y[:, reflect(h + oh)*W + w]   (row shift w/ reflection)
        if oh == 0:
            return y
        if oh < 0:   # row 0 reflects row 1
            return jnp.concatenate([y[:, W:2 * W], y[:, :HW - W]], axis=1)
        # row H-1 reflects row H-2
        return jnp.concatenate([y[:, W:], y[:, HW - 2 * W:HW - W]], axis=1)

    def conv3x3(y, w_aug_ref):
        # Column shifts with reflection (shared across the 3 row offsets).
        lo = cyc(y, 1)                                   # y[:, p+1]
        hi = cyc(y, -1)                                  # y[:, p-1]
        w_m1 = jnp.where(is_w0, lo, hi)                  # y[:, h, reflect(w-1)]
        w_p1 = jnp.where(is_wl, hi, lo)                  # y[:, h, reflect(w+1)]
        cols3 = (w_m1, y, w_p1)
        # 9 taps (kh outer, kw inner) + ones row -> (9*C + 1, HW) patch matrix.
        taps = [hshift(cols3[kw], kh - 1) for kh in range(3) for kw in range(3)]
        patches = jnp.concatenate(taps + [ones_row], axis=0)
        w_aug = w_aug_ref[...].astype(jnp.float32)       # (C, 9*C + 1), bias in last col
        return jnp.dot(w_aug, patches, preferred_element_type=jnp.float32)

    inv_hw = 1.0 / HW

    def instance_norm(y):
        # per-channel stats over the lane (spatial) axis; biased variance, no affine
        s1 = jnp.sum(y, axis=1, keepdims=True)
        s2 = jnp.sum(y * y, axis=1, keepdims=True)
        m = s1 * inv_hw
        v = jnp.maximum(s2 * inv_hw - m * m, 0.0)
        return (y - m) * lax.rsqrt(v + EPS)

    h1 = jnp.maximum(instance_norm(conv3x3(x, w1_ref)), 0.0)   # ReLU
    h2 = instance_norm(conv3x3(h1, w2_ref))
    o_ref[...] = (x + h2).astype(o_ref.dtype)                  # lane-dense store


def residual_block(x_nchw, w1, b1, w2, b2):
    """x_nchw: (B, C, H, W); w*: (Cout, Cin, 3, 3) PyTorch layout; b*: (C,)."""
    B, C, H, W = x_nchw.shape
    HW = H * W
    x = x_nchw.reshape(B, C, HW)                         # free reshape, no transpose

    def prep(w, b):
        # (Cout, Cin, 3, 3) -> (Cout, 9*Cin) with tap order (kh, kw, ci),
        # then append bias as the last column (pairs with the ones row).
        wm = jnp.transpose(w, (2, 3, 1, 0)).reshape(9 * C, C).T
        return jnp.concatenate([wm, b.reshape(C, 1)], axis=1).astype(jnp.float32)

    w1a = prep(w1, b1)                                   # (C, 9*C + 1)
    w2a = prep(w2, b2)
    col_ids = (jnp.arange(HW, dtype=jnp.int32) % W).reshape(1, HW)

    kernel = functools.partial(_resblock_kernel, W=W)
    out = pl.pallas_call(
        kernel,
        out_shape=jax.ShapeDtypeStruct((B, C, HW), x.dtype),
        grid=(B,),
        in_specs=[
            pl.BlockSpec((None, C, HW), lambda b: (b, 0, 0)),     # x (batch squeezed)
            pl.BlockSpec((C, 9 * C + 1), lambda b: (0, 0)),       # w1 (+bias)
            pl.BlockSpec((C, 9 * C + 1), lambda b: (0, 0)),       # w2 (+bias)
            pl.BlockSpec((1, HW), lambda b: (0, 0)),              # column indices
        ],
        out_specs=pl.BlockSpec((None, C, HW), lambda b: (b, 0, 0)),
        compiler_params=pltpu.CompilerParams(
            dimension_semantics=("parallel",),
            vmem_limit_bytes=64 * 1024 * 1024,
        ),
    )(x, w1a, w2a, col_ids)

    return out.reshape(B, C, H, W)


# ---------------- pure-JAX reference (for validation only) ----------------
def _ref_forward(x_nchw, w1, b1, w2, b2):
    x = jnp.transpose(x_nchw, (0, 2, 3, 1)).astype(jnp.float32)   # NHWC

    def conv(y, w, b):
        yp = jnp.pad(y, ((0, 0), (1, 1), (1, 1), (0, 0)), mode="reflect")
        wk = jnp.transpose(w, (2, 3, 1, 0)).astype(jnp.float32)   # HWIO
        out = lax.conv_general_dilated(
            yp, wk, window_strides=(1, 1), padding="VALID",
            dimension_numbers=("NHWC", "HWIO", "NHWC"))
        return out + b.reshape(1, 1, 1, -1)

    def inorm(y):
        m = jnp.mean(y, axis=(1, 2), keepdims=True)
        v = jnp.mean((y - m) ** 2, axis=(1, 2), keepdims=True)
        return (y - m) / jnp.sqrt(v + EPS)

    h = jnp.maximum(inorm(conv(x, w1, b1)), 0.0)
    h = inorm(conv(h, w2, b2))
    return jnp.transpose(x + h, (0, 3, 1, 2))


if __name__ == "__main__":
    B, C, H, W = 2, 4, 16, 16
    key = jax.random.PRNGKey(0)
    kx, k1, k2, k3, k4 = jax.random.split(key, 5)

    x = jax.random.normal(kx, (B, C, H, W), dtype=jnp.float32)
    w1 = jax.random.normal(k1, (C, C, 3, 3), dtype=jnp.float32) * 0.1
    b1 = jax.random.normal(k2, (C,), dtype=jnp.float32) * 0.1
    w2 = jax.random.normal(k3, (C, C, 3, 3), dtype=jnp.float32) * 0.1
    b2 = jax.random.normal(k4, (C,), dtype=jnp.float32) * 0.1

    out = jax.block_until_ready(residual_block(x, w1, b1, w2, b2))

    ref = jax.block_until_ready(_ref_forward(x, w1, b1, w2, b2))
    assert out.shape == (B, C, H, W)
    assert jnp.allclose(out, ref, atol=1e-4, rtol=1e-4), "mismatch vs reference"

    print("KERNEL_OK")
</pallas_src>

<mosaic_0001>
module attributes {stable_mosaic.version = 11 : i64} {
  func.func @_resblock_kernel(%arg0: i32, %arg1: memref<1x4x256xf32, #tpu.memory_space<vmem>>, %arg2: memref<4x37xf32, #tpu.memory_space<vmem>>, %arg3: memref<4x37xf32, #tpu.memory_space<vmem>>, %arg4: memref<1x256xi32, #tpu.memory_space<vmem>>, %arg5: memref<1x4x256xf32, #tpu.memory_space<vmem>>) attributes {dimension_semantics = [#tpu.dimension_semantics<parallel>], iteration_bounds = array<i64: 2>, scalar_prefetch = 0 : i64, scratch_operands = 0 : i64, tpu.core_type = #tpu.core_type<tc>, window_params = [{transform_indices = @transform_0, window_bounds = array<i64: 1, 4, 256>}, {pipeline_mode = #tpu.pipeline_mode<synchronous>, transform_indices = @transform_1, window_bounds = array<i64: 4, 37>}, {pipeline_mode = #tpu.pipeline_mode<synchronous>, transform_indices = @transform_2, window_bounds = array<i64: 4, 37>}, {pipeline_mode = #tpu.pipeline_mode<synchronous>, transform_indices = @transform_3, window_bounds = array<i64: 1, 256>}, {transform_indices = @transform_4, window_bounds = array<i64: 1, 4, 256>}]} {
    %c0 = arith.constant 0 : index
    %c0_0 = arith.constant 0 : index
    %c0_1 = arith.constant 0 : index
    %0 = vector.load %arg1[%c0, %c0_0, %c0_1] : memref<1x4x256xf32, #tpu.memory_space<vmem>>, vector<1x4x256xf32>
    %1 = vector.shape_cast %0 : vector<1x4x256xf32> to vector<4x256xf32>
    %c0_2 = arith.constant 0 : index
    %c0_3 = arith.constant 0 : index
    %2 = vector.load %arg4[%c0_2, %c0_3] : memref<1x256xi32, #tpu.memory_space<vmem>>, vector<1x256xi32>
    %c0_i32 = arith.constant 0 : i32
    %3 = vector.broadcast %c0_i32 : i32 to vector<1x256xi32>
    %4 = arith.cmpi eq, %2, %3 : vector<1x256xi32>
    %5 = vector.shape_cast %4 : vector<1x256xi1> to vector<1x256xi1>
    %6 = vector.broadcast %5 : vector<1x256xi1> to vector<4x256xi1>
    %c15_i32 = arith.constant 15 : i32
    %7 = vector.broadcast %c15_i32 : i32 to vector<1x256xi32>
    %8 = arith.cmpi eq, %2, %7 : vector<1x256xi32>
    %9 = vector.shape_cast %8 : vector<1x256xi1> to vector<1x256xi1>
    %10 = vector.broadcast %9 : vector<1x256xi1> to vector<4x256xi1>
    %cst = arith.constant 1.000000e+00 : f32
    %11 = vector.broadcast %cst : f32 to vector<1x256xf32>
    %12 = vector.extract_strided_slice %1 {offsets = [0, 1], sizes = [4, 255], strides = [1, 1]} : vector<4x256xf32> to vector<4x255xf32>
    %13 = vector.extract_strided_slice %1 {offsets = [0, 0], sizes = [4, 1], strides = [1, 1]} : vector<4x256xf32> to vector<4x1xf32>
    %14 = tpu.concatenate %12, %13 in 1 : vector<4x255xf32>, vector<4x1xf32> -> vector<4x256xf32>
    %15 = vector.extract_strided_slice %1 {offsets = [0, 255], sizes = [4, 1], strides = [1, 1]} : vector<4x256xf32> to vector<4x1xf32>
    %16 = vector.extract_strided_slice %1 {offsets = [0, 0], sizes = [4, 255], strides = [1, 1]} : vector<4x256xf32> to vector<4x255xf32>
    %17 = tpu.concatenate %15, %16 in 1 : vector<4x1xf32>, vector<4x255xf32> -> vector<4x256xf32>
    %18 = arith.select %6, %14, %17 : vector<4x256xi1>, vector<4x256xf32>
    %19 = arith.select %10, %17, %14 : vector<4x256xi1>, vector<4x256xf32>
    %20 = vector.extract_strided_slice %18 {offsets = [0, 16], sizes = [4, 16], strides = [1, 1]} : vector<4x256xf32> to vector<4x16xf32>
    %21 = vector.extract_strided_slice %18 {offsets = [0, 0], sizes = [4, 240], strides = [1, 1]} : vector<4x256xf32> to vector<4x240xf32>
    %22 = tpu.concatenate %20, %21 in 1 : vector<4x16xf32>, vector<4x240xf32> -> vector<4x256xf32>
    %23 = vector.extract_strided_slice %1 {offsets = [0, 16], sizes = [4, 16], strides = [1, 1]} : vector<4x256xf32> to vector<4x16xf32>
    %24 = vector.extract_strided_slice %1 {offsets = [0, 0], sizes = [4, 240], strides = [1, 1]} : vector<4x256xf32> to vector<4x240xf32>
    %25 = tpu.concatenate %23, %24 in 1 : vector<4x16xf32>, vector<4x240xf32> -> vector<4x256xf32>
    %26 = vector.extract_strided_slice %19 {offsets = [0, 16], sizes = [4, 16], strides = [1, 1]} : vector<4x256xf32> to vector<4x16xf32>
    %27 = vector.extract_strided_slice %19 {offsets = [0, 0], sizes = [4, 240], strides = [1, 1]} : vector<4x256xf32> to vector<4x240xf32>
    %28 = tpu.concatenate %26, %27 in 1 : vector<4x16xf32>, vector<4x240xf32> -> vector<4x256xf32>
    %29 = vector.extract_strided_slice %18 {offsets = [0, 16], sizes = [4, 240], strides = [1, 1]} : vector<4x256xf32> to vector<4x240xf32>
    %30 = vector.extract_strided_slice %18 {offsets = [0, 224], sizes = [4, 16], strides = [1, 1]} : vector<4x256xf32> to vector<4x16xf32>
    %31 = tpu.concatenate %29, %30 in 1 : vector<4x240xf32>, vector<4x16xf32> -> vector<4x256xf32>
    %32 = vector.extract_strided_slice %1 {offsets = [0, 16], sizes = [4, 240], strides = [1, 1]} : vector<4x256xf32> to vector<4x240xf32>
    %33 = vector.extract_strided_slice %1 {offsets = [0, 224], sizes = [4, 16], strides = [1, 1]} : vector<4x256xf32> to vector<4x16xf32>
    %34 = tpu.concatenate %32, %33 in 1 : vector<4x240xf32>, vector<4x16xf32> -> vector<4x256xf32>
    %35 = vector.extract_strided_slice %19 {offsets = [0, 16], sizes = [4, 240], strides = [1, 1]} : vector<4x256xf32> to vector<4x240xf32>
    %36 = vector.extract_strided_slice %19 {offsets = [0, 224], sizes = [4, 16], strides = [1, 1]} : vector<4x256xf32> to vector<4x16xf32>
    %37 = tpu.concatenate %35, %36 in 1 : vector<4x240xf32>, vector<4x16xf32> -> vector<4x256xf32>
    %38 = tpu.concatenate %22, %25, %28, %18, %1, %19, %31, %34, %37, %11 in 0 : vector<4x256xf32>, vector<4x256xf32>, vector<4x256xf32>, vector<4x256xf32>, vector<4x256xf32>, vector<4x256xf32>, vector<4x256xf32>, vector<4x256xf32>, vector<4x256xf32>, vector<1x256xf32> -> vector<37x256xf32>
    %c0_4 = arith.constant 0 : index
    %c0_5 = arith.constant 0 : index
    %39 = vector.load %arg2[%c0_4, %c0_5] : memref<4x37xf32, #tpu.memory_space<vmem>>, vector<4x37xf32>
    %cst_6 = arith.constant dense<0.000000e+00> : vector<4x256xf32>
    %40 = tpu.matmul %39, %38, %cst_6 {dimension_numbers = #tpu.dot_dimension_numbers<[1], [0], [0], [1], [0, 0, 1, 1], [], []>} : vector<4x37xf32>, vector<37x256xf32>, vector<4x256xf32> -> vector<4x256xf32>
    %cst_7 = arith.constant dense<0.000000e+00> : vector<4xf32>
    %41 = vector.multi_reduction <add>, %40, %cst_7 [1] : vector<4x256xf32> to vector<4xf32>
    %42 = vector.shape_cast %41 : vector<4xf32> to vector<4x1xf32>
    %43 = arith.mulf %40, %40 : vector<4x256xf32>
    %cst_8 = arith.constant dense<0.000000e+00> : vector<4xf32>
    %44 = vector.multi_reduction <add>, %43, %cst_8 [1] : vector<4x256xf32> to vector<4xf32>
    %45 = vector.shape_cast %44 : vector<4xf32> to vector<4x1xf32>
    %cst_9 = arith.constant 3.906250e-03 : f32
    %46 = vector.broadcast %cst_9 : f32 to vector<4x1xf32>
    %47 = arith.mulf %42, %46 : vector<4x1xf32>
    %cst_10 = arith.constant 3.906250e-03 : f32
    %48 = vector.broadcast %cst_10 : f32 to vector<4x1xf32>
    %49 = arith.mulf %45, %48 : vector<4x1xf32>
    %50 = arith.mulf %47, %47 : vector<4x1xf32>
    %51 = arith.subf %49, %50 : vector<4x1xf32>
    %cst_11 = arith.constant 0.000000e+00 : f32
    %52 = vector.broadcast %cst_11 : f32 to vector<4x1xf32>
    %53 = arith.maximumf %51, %52 : vector<4x1xf32>
    %54 = vector.broadcast %47 : vector<4x1xf32> to vector<4x256xf32>
    %55 = arith.subf %40, %54 : vector<4x256xf32>
    %cst_12 = arith.constant 9.99999974E-6 : f32
    %56 = vector.broadcast %cst_12 : f32 to vector<4x1xf32>
    %57 = arith.addf %53, %56 : vector<4x1xf32>
    %58 = math.rsqrt %57 : vector<4x1xf32>
    %59 = vector.broadcast %58 : vector<4x1xf32> to vector<4x256xf32>
    %60 = arith.mulf %55, %59 : vector<4x256xf32>
    %cst_13 = arith.constant 0.000000e+00 : f32
    %61 = vector.broadcast %cst_13 : f32 to vector<4x256xf32>
    %62 = arith.maximumf %60, %61 : vector<4x256xf32>
    %63 = vector.extract_strided_slice %62 {offsets = [0, 1], sizes = [4, 255], strides = [1, 1]} : vector<4x256xf32> to vector<4x255xf32>
    %64 = vector.extract_strided_slice %62 {offsets = [0, 0], sizes = [4, 1], strides = [1, 1]} : vector<4x256xf32> to vector<4x1xf32>
    %65 = tpu.concatenate %63, %64 in 1 : vector<4x255xf32>, vector<4x1xf32> -> vector<4x256xf32>
    %66 = vector.extract_strided_slice %62 {offsets = [0, 255], sizes = [4, 1], strides = [1, 1]} : vector<4x256xf32> to vector<4x1xf32>
    %67 = vector.extract_strided_slice %62 {offsets = [0, 0], sizes = [4, 255], strides = [1, 1]} : vector<4x256xf32> to vector<4x255xf32>
    %68 = tpu.concatenate %66, %67 in 1 : vector<4x1xf32>, vector<4x255xf32> -> vector<4x256xf32>
    %69 = arith.select %6, %65, %68 : vector<4x256xi1>, vector<4x256xf32>
    %70 = arith.select %10, %68, %65 : vector<4x256xi1>, vector<4x256xf32>
    %71 = vector.extract_strided_slice %69 {offsets = [0, 16], sizes = [4, 16], strides = [1, 1]} : vector<4x256xf32> to vector<4x16xf32>
    %72 = vector.extract_strided_slice %69 {offsets = [0, 0], sizes = [4, 240], strides = [1, 1]} : vector<4x256xf32> to vector<4x240xf32>
    %73 = tpu.concatenate %71, %72 in 1 : vector<4x16xf32>, vector<4x240xf32> -> vector<4x256xf32>
    %74 = vector.extract_strided_slice %62 {offsets = [0, 16], sizes = [4, 16], strides = [1, 1]} : vector<4x256xf32> to vector<4x16xf32>
    %75 = vector.extract_strided_slice %62 {offsets = [0, 0], sizes = [4, 240], strides = [1, 1]} : vector<4x256xf32> to vector<4x240xf32>
    %76 = tpu.concatenate %74, %75 in 1 : vector<4x16xf32>, vector<4x240xf32> -> vector<4x256xf32>
    %77 = vector.extract_strided_slice %70 {offsets = [0, 16], sizes = [4, 16], strides = [1, 1]} : vector<4x256xf32> to vector<4x16xf32>
    %78 = vector.extract_strided_slice %70 {offsets = [0, 0], sizes = [4, 240], strides = [1, 1]} : vector<4x256xf32> to vector<4x240xf32>
    %79 = tpu.concatenate %77, %78 in 1 : vector<4x16xf32>, vector<4x240xf32> -> vector<4x256xf32>
    %80 = vector.extract_strided_slice %69 {offsets = [0, 16], sizes = [4, 240], strides = [1, 1]} : vector<4x256xf32> to vector<4x240xf32>
    %81 = vector.extract_strided_slice %69 {offsets = [0, 224], sizes = [4, 16], strides = [1, 1]} : vector<4x256xf32> to vector<4x16xf32>
    %82 = tpu.concatenate %80, %81 in 1 : vector<4x240xf32>, vector<4x16xf32> -> vector<4x256xf32>
    %83 = vector.extract_strided_slice %62 {offsets = [0, 16], sizes = [4, 240], strides = [1, 1]} : vector<4x256xf32> to vector<4x240xf32>
    %84 = vector.extract_strided_slice %62 {offsets = [0, 224], sizes = [4, 16], strides = [1, 1]} : vector<4x256xf32> to vector<4x16xf32>
    %85 = tpu.concatenate %83, %84 in 1 : vector<4x240xf32>, vector<4x16xf32> -> vector<4x256xf32>
    %86 = vector.extract_strided_slice %70 {offsets = [0, 16], sizes = [4, 240], strides = [1, 1]} : vector<4x256xf32> to vector<4x240xf32>
    %87 = vector.extract_strided_slice %70 {offsets = [0, 224], sizes = [4, 16], strides = [1, 1]} : vector<4x256xf32> to vector<4x16xf32>
    %88 = tpu.concatenate %86, %87 in 1 : vector<4x240xf32>, vector<4x16xf32> -> vector<4x256xf32>
    %89 = tpu.concatenate %73, %76, %79, %69, %62, %70, %82, %85, %88, %11 in 0 : vector<4x256xf32>, vector<4x256xf32>, vector<4x256xf32>, vector<4x256xf32>, vector<4x256xf32>, vector<4x256xf32>, vector<4x256xf32>, vector<4x256xf32>, vector<4x256xf32>, vector<1x256xf32> -> vector<37x256xf32>
    %c0_14 = arith.constant 0 : index
    %c0_15 = arith.constant 0 : index
    %90 = vector.load %arg3[%c0_14, %c0_15] : memref<4x37xf32, #tpu.memory_space<vmem>>, vector<4x37xf32>
    %cst_16 = arith.constant dense<0.000000e+00> : vector<4x256xf32>
    %91 = tpu.matmul %90, %89, %cst_16 {dimension_numbers = #tpu.dot_dimension_numbers<[1], [0], [0], [1], [0, 0, 1, 1], [], []>} : vector<4x37xf32>, vector<37x256xf32>, vector<4x256xf32> -> vector<4x256xf32>
    %cst_17 = arith.constant dense<0.000000e+00> : vector<4xf32>
    %92 = vector.multi_reduction <add>, %91, %cst_17 [1] : vector<4x256xf32> to vector<4xf32>
    %93 = vector.shape_cast %92 : vector<4xf32> to vector<4x1xf32>
    %94 = arith.mulf %91, %91 : vector<4x256xf32>
    %cst_18 = arith.constant dense<0.000000e+00> : vector<4xf32>
    %95 = vector.multi_reduction <add>, %94, %cst_18 [1] : vector<4x256xf32> to vector<4xf32>
    %96 = vector.shape_cast %95 : vector<4xf32> to vector<4x1xf32>
    %cst_19 = arith.constant 3.906250e-03 : f32
    %97 = vector.broadcast %cst_19 : f32 to vector<4x1xf32>
    %98 = arith.mulf %93, %97 : vector<4x1xf32>
    %cst_20 = arith.constant 3.906250e-03 : f32
    %99 = vector.broadcast %cst_20 : f32 to vector<4x1xf32>
    %100 = arith.mulf %96, %99 : vector<4x1xf32>
    %101 = arith.mulf %98, %98 : vector<4x1xf32>
    %102 = arith.subf %100, %101 : vector<4x1xf32>
    %cst_21 = arith.constant 0.000000e+00 : f32
    %103 = vector.broadcast %cst_21 : f32 to vector<4x1xf32>
    %104 = arith.maximumf %102, %103 : vector<4x1xf32>
    %105 = vector.broadcast %98 : vector<4x1xf32> to vector<4x256xf32>
    %106 = arith.subf %91, %105 : vector<4x256xf32>
    %cst_22 = arith.constant 9.99999974E-6 : f32
    %107 = vector.broadcast %cst_22 : f32 to vector<4x1xf32>
    %108 = arith.addf %104, %107 : vector<4x1xf32>
    %109 = math.rsqrt %108 : vector<4x1xf32>
    %110 = vector.broadcast %109 : vector<4x1xf32> to vector<4x256xf32>
    %111 = arith.mulf %106, %110 : vector<4x256xf32>
    %112 = arith.addf %1, %111 : vector<4x256xf32>
    %c0_23 = arith.constant 0 : index
    %c0_24 = arith.constant 0 : index
    %c0_25 = arith.constant 0 : index
    %113 = vector.load %arg5[%c0_23, %c0_24, %c0_25] : memref<1x4x256xf32, #tpu.memory_space<vmem>>, vector<1x4x256xf32>
    %114 = vector.shape_cast %113 : vector<1x4x256xf32> to vector<4x256xf32>
    %115 = vector.shape_cast %112 : vector<4x256xf32> to vector<1x4x256xf32>
    tpu.vector_store %arg5[%c0_23, %c0_24, %c0_25], %115 {strides = array<i32>} : memref<1x4x256xf32, #tpu.memory_space<vmem>>, vector<1x4x256xf32>,
    return
  }
  func.func @transform_0(%arg0: i32) -> (i32, i32, i32) {
    %c0_i32 = arith.constant 0 : i32
    %c0_i32_0 = arith.constant 0 : i32
    %c0_i32_1 = arith.constant 0 : i32
    return %arg0, %c0_i32, %c0_i32_0 : i32, i32, i32
  }
  func.func @transform_1(%arg0: i32) -> (i32, i32) {
    %c0_i32 = arith.constant 0 : i32
    %c0_i32_0 = arith.constant 0 : i32
    %c0_i32_1 = arith.constant 0 : i32
    return %c0_i32, %c0_i32_0 : i32, i32
  }
  func.func @transform_2(%arg0: i32) -> (i32, i32) {
    %c0_i32 = arith.constant 0 : i32
    %c0_i32_0 = arith.constant 0 : i32
    %c0_i32_1 = arith.constant 0 : i32
    return %c0_i32, %c0_i32_0 : i32, i32
  }
  func.func @transform_3(%arg0: i32) -> (i32, i32) {
    %c0_i32 = arith.constant 0 : i32
    %c0_i32_0 = arith.constant 0 : i32
    %c0_i32_1 = arith.constant 0 : i32
    return %c0_i32, %c0_i32_0 : i32, i32
  }
  func.func @transform_4(%arg0: i32) -> (i32, i32, i32) {
    %c0_i32 = arith.constant 0 : i32
    %c0_i32_0 = arith.constant 0 : i32
    %c0_i32_1 = arith.constant 0 : i32
    return %arg0, %c0_i32, %c0_i32_0 : i32, i32, i32
  }
}

</mosaic_0001>

<llo_original>
// kernel: tpu_custom_call.1
$region0: #{tpu_custom_call.1}
  #allocation0 [shape = 'u32[]', space=smem, size = 0x4, offset = 0x4, fixed_abs, tag = 'smem constant byte address 0x4 - core index']
  #allocation1 [shape = 'u32[144,128]{1,0:T(1,128)}', space=vmem, size = 0x12000, scoped, tag = 'internal scratch']
  %s0 = inlined_call_operand.hbm [shape: f32[2,4,256], index: 0, kind: input, shape index: {}]
  %s1 = inlined_call_operand.hbm [shape: f32[4,37], index: 1, kind: input, shape index: {}]
  %s2 = inlined_call_operand.hbm [shape: f32[4,37], index: 2, kind: input, shape index: {}]
  %s3 = inlined_call_operand.hbm [shape: s32[1,256], index: 3, kind: input, shape index: {}]
  %s4 = inlined_call_operand.hbm [shape: f32[2,4,256], index: 4, kind: output, shape index: {}]
  %s5 = sld [smem:[#allocation0]]
  $region65: #{tpu_custom_call.1} parent=0
    _
  %s7 = ssub.s32 1, %s5
  %s8 = scalar_select 0, %s7, %s5
  $region1: #{tpu_custom_call.1} parent=0
    #allocation2 [shape = 'u8[8192]{0}', space=vmem, size = 0x2000, scoped, tag = 'input window, operand 0']
    #allocation3 [shape = 's32[2]{0}', space=sflag, size = 0x8, scoped, tag = 'scoped memory for tpu_custom_call.1']
    #allocation4 [shape = 's32[2]{0}', space=sflag, size = 0x8, scoped, tag = 'scoped memory for tpu_custom_call.1']
    #allocation5 [shape = 'u8[2048]{0}', space=vmem, size = 0x800, scoped, tag = 'input window, operand 1, single buffered']
    #allocation6 [shape = 's32[1]{0}', space=sflag, size = 0x4, scoped, tag = 'scoped memory for tpu_custom_call.1']
    #allocation7 [shape = 'u8[2048]{0}', space=vmem, size = 0x800, scoped, tag = 'input window, operand 2, single buffered']
    #allocation8 [shape = 'u8[1024]{0}', space=vmem, size = 0x400, scoped, tag = 'input window, operand 3, single buffered']
    #allocation9 [shape = 's32[1]{0}', space=sflag, size = 0x4, scoped, tag = 'scoped memory for tpu_custom_call.1']
    #allocation10 [shape = 'u8[8192]{0}', space=vmem, size = 0x2000, scoped, tag = 'output window, operand 0']
    %9 = vsyncpa [#allocation3], 0
    %s10 = scalar_lea.sflag [#allocation3], 1
    %11 = vsyncpa %s10, 0
    %12 = vsyncpa [#allocation6], 0
    %13 = vsyncpa [#allocation9], 0
    %14 = vsyncpa [#allocation4], 0
    %s15 = scalar_lea.sflag [#allocation4], 1
    %16 = vsyncpa %s15, 0
    loop: start=0, step=1, limit=4
    $region2: #{tpu_custom_call.1} parent=1 // loop_pre_header
      _
    $region3: #{tpu_custom_call.1} parent=1 // loop_header
      %s18 = sphi 0, %s22
      %p19 = scmp.ge.s32.totalorder %s18, 4
      %s28 = sphi 0, %s30
      %s31 = sphi 0, %s28
      %s32 = sphi 0, %s31
      %s48 = sphi 0, %s32
      %s52 = sphi 0, %s52
      %s54 = sphi 0, %s52
      %s55 = sphi 0, %s54
      %s69 = sphi 0, %s55
      %s73 = sphi 0, %s73
      %s75 = sphi 0, %s73
      %s76 = sphi 0, %s75
      %s90 = sphi 0, %s76
      %s94 = sphi 0, %s94
      %s96 = sphi 0, %s94
      %s97 = sphi 0, %s96
      %s111 = sphi 0, %s97
      %s117 = sphi 0, %s119
      %s120 = sphi 0, %s117
      %s121 = sphi 0, %s120
      %s137 = sphi 0, %s121
    $region4: #{tpu_custom_call.1} parent=1 // loop_header_branch
      %21 = sbr.rel (%p19) target = $region8
    $region5: #{tpu_custom_call.1} parent=1 // loop_body
      %s23 = ssub.s32 %s18, 1
      %s24 = ssub.s32 %s18, 2
      %s25 = sadd.s32 %s18, 1
      %s26 = ssub.s32 %s18, %s25
      %p27 = scmp.eq.s32.totalorder %s26, 0
      %s29 = sadd.s32 %s28, 1
      %s30 = scalar_select %p27, %s28, %s29
      %p33 = pneg %p27
      %p34 = scmp.eq.s32.totalorder %s18, 1
      %p35 = por %p33, %p34
      %p36 = scmp.ne.s32.totalorder %s28, %s31
      %p37 = scmp.eq.s32.totalorder %s18, 0
      %p38 = por %p36, %p37
      %p39 = scmp.ne.s32.totalorder %s28, %s31
      %p40 = scmp.eq.s32.totalorder %s23, 1
      %p41 = por %p39, %p40
      %p42 = scmp.ne.s32.totalorder %s31, %s32
      %p43 = scmp.eq.s32.totalorder %s23, 0
      %p44 = por %p42, %p43
      %p45 = scmp.ne.s32.totalorder %s31, %s32
      %p46 = scmp.eq.s32.totalorder %s24, 1
      %p47 = por %p45, %p46
      %p49 = scmp.ne.s32.totalorder %s32, %s48
      %p50 = scmp.eq.s32.totalorder %s24, 0
      %p51 = por %p49, %p50
      %s53 = sadd.s32 %s52, 1
      %p56 = scmp.eq.s32.totalorder %s18, 1
      %p57 = scmp.ne.s32.totalorder %s52, %s54
      %p58 = scmp.eq.s32.totalorder %s18, 0
      %p59 = por %p57, %p58
      %p60 = scmp.ne.s32.totalorder %s52, %s54
      %p61 = scmp.eq.s32.totalorder %s23, 1
      %p62 = por %p60, %p61
      %p63 = scmp.ne.s32.totalorder %s54, %s55
      %p64 = scmp.eq.s32.totalorder %s23, 0
      %p65 = por %p63, %p64
      %p66 = scmp.ne.s32.totalorder %s54, %s55
      %p67 = scmp.eq.s32.totalorder %s24, 1
      %p68 = por %p66, %p67
      %p70 = scmp.ne.s32.totalorder %s55, %s69
      %p71 = scmp.eq.s32.totalorder %s24, 0
      %p72 = por %p70, %p71
      %s74 = sadd.s32 %s73, 1
      %p77 = scmp.eq.s32.totalorder %s18, 1
      %p78 = scmp.ne.s32.totalorder %s73, %s75
      %p79 = scmp.eq.s32.totalorder %s18, 0
      %p80 = por %p78, %p79
      %p81 = scmp.ne.s32.totalorder %s73, %s75
      %p82 = scmp.eq.s32.totalorder %s23, 1
      %p83 = por %p81, %p82
      %p84 = scmp.ne.s32.totalorder %s75, %s76
      %p85 = scmp.eq.s32.totalorder %s23, 0
      %p86 = por %p84, %p85
      %p87 = scmp.ne.s32.totalorder %s75, %s76
      %p88 = scmp.eq.s32.totalorder %s24, 1
      %p89 = por %p87, %p88
      %p91 = scmp.ne.s32.totalorder %s76, %s90
      %p92 = scmp.eq.s32.totalorder %s24, 0
      %p93 = por %p91, %p92
      %s95 = sadd.s32 %s94, 1
      %p98 = scmp.eq.s32.totalorder %s18, 1
      %p99 = scmp.ne.s32.totalorder %s94, %s96
      %p100 = scmp.eq.s32.totalorder %s18, 0
      %p101 = por %p99, %p100
      %p102 = scmp.ne.s32.totalorder %s94, %s96
      %p103 = scmp.eq.s32.totalorder %s23, 1
      %p104 = por %p102, %p103
      %p105 = scmp.ne.s32.totalorder %s96, %s97
      %p106 = scmp.eq.s32.totalorder %s23, 0
      %p107 = por %p105, %p106
      %p108 = scmp.ne.s32.totalorder %s96, %s97
      %p109 = scmp.eq.s32.totalorder %s24, 1
      %p110 = por %p108, %p109
      %p112 = scmp.ne.s32.totalorder %s97, %s111
      %p113 = scmp.eq.s32.totalorder %s24, 0
      %p114 = por %p112, %p113
      %s115 = ssub.s32 %s18, %s25
      %p116 = scmp.eq.s32.totalorder %s115, 0
      %s118 = sadd.s32 %s117, 1
      %s119 = scalar_select %p116, %s117, %s118
      %p122 = pneg %p116
      %p123 = scmp.eq.s32.totalorder %s18, 1
      %p124 = por %p122, %p123
      %p125 = scmp.ne.s32.totalorder %s117, %s120
      %p126 = scmp.eq.s32.totalorder %s18, 0
      %p127 = por %p125, %p126
      %p128 = scmp.ne.s32.totalorder %s117, %s120
      %p129 = scmp.eq.s32.totalorder %s23, 1
      %p130 = por %p128, %p129
      %p131 = scmp.ne.s32.totalorder %s120, %s121
      %p132 = scmp.eq.s32.totalorder %s23, 0
      %p133 = por %p131, %p132
      %p134 = scmp.ne.s32.totalorder %s120, %s121
      %p135 = scmp.eq.s32.totalorder %s24, 1
      %p136 = por %p134, %p135
      %p138 = scmp.ne.s32.totalorder %s121, %s137
      %p139 = scmp.eq.s32.totalorder %s24, 0
      %p140 = por %p138, %p139
      %p141 = scmp.le.s32.totalorder 1, %s18
      %p142 = scmp.lt.s32.totalorder %s18, 3
      %p143 = pnand %p141, %p142
      %p144 = pneg %p143
      // Predicated region
      $region9: #{tpu_custom_call.1} parent=5 // pred_check
        _
      $region10: #{tpu_custom_call.1} parent=5 // pred_check_branch
        %146 = sbr.rel (%p143) target = $region12
      $region11: #{tpu_custom_call.1} parent=5 // pred_region
        %s147 = ssub.s32 %s18, 1
        // Predicated region
        $region13: #{tpu_custom_call.1} parent=11 // pred_check
          %p148 = pneg %p65
        $region14: #{tpu_custom_call.1} parent=11 // pred_check_branch
          %150 = sbr.rel (%p148) target = $region16
        $region15: #{tpu_custom_call.1} parent=11 // pred_region
          %s152 = ssub.s32 64, 64
          %153 = vsyncadd [#allocation6], %s152
          %s155 = sshll.u32 [#allocation5], 4
          %s156 = int_to_ptr.vmem [resolvable:$true] %s155
          %158 = dma.hbm_to_vmem [thread:$0]  %s1, 64, %s156, [#allocation6]
        $region16: #{tpu_custom_call.1} parent=11 // pred_fallthru
          _
        // Predicated region
        $region17: #{tpu_custom_call.1} parent=11 // pred_check
          %p159 = pneg %p86
        $region18: #{tpu_custom_call.1} parent=11 // pred_check_branch
          %161 = sbr.rel (%p159) target = $region20
        $region19: #{tpu_custom_call.1} parent=11 // pred_region
          %s163 = ssub.s32 64, 64
          %164 = vsyncadd [#allocation6], %s163
          %s166 = sshll.u32 [#allocation7], 4
          %s167 = int_to_ptr.vmem [resolvable:$true] %s166
          %169 = dma.hbm_to_vmem [thread:$0]  %s2, 64, %s167, [#allocation6]
        $region20: #{tpu_custom_call.1} parent=11 // pred_fallthru
          _
        // Predicated region
        $region21: #{tpu_custom_call.1} parent=11 // pred_check
          %p170 = pneg %p107
        $region22: #{tpu_custom_call.1} parent=11 // pred_check_branch
          %172 = sbr.rel (%p170) target = $region24
        $region23: #{tpu_custom_call.1} parent=11 // pred_region
          %s174 = ssub.s32 32, 32
          %175 = vsyncadd [#allocation9], %s174
          %s177 = sshll.u32 [#allocation8], 4
          %s178 = int_to_ptr.vmem [resolvable:$true] %s177
          %180 = dma.hbm_to_vmem [thread:$0]  %s3, 32, %s178, [#allocation9]
        $region24: #{tpu_custom_call.1} parent=11 // pred_fallthru
          _
      $region12: #{tpu_custom_call.1} parent=5 // pred_fallthru
        _
      %p181 = scmp.lt.s32.totalorder %s18, 2
      // Predicated region
      $region25: #{tpu_custom_call.1} parent=5 // pred_check
        %p182 = pneg %p181
      $region26: #{tpu_custom_call.1} parent=5 // pred_check_branch
        %184 = sbr.rel (%p182) target = $region28
      $region27: #{tpu_custom_call.1} parent=5 // pred_region
        // Predicated region
        $region29: #{tpu_custom_call.1} parent=27 // pred_check
          %p185 = pneg %p38
        $region30: #{tpu_custom_call.1} parent=27 // pred_check_branch
          %187 = sbr.rel (%p185) target = $region32
        $region31: #{tpu_custom_call.1} parent=27 // pred_region
          %s188 = sand.u32 %s28, 1
          %s189 = scalar_lea.sflag [#allocation3], %s188
          %s190 = sand.u32 %s28, 1
          %s191 = smul.addr %s190, 8
          %s192 = scalar_lea.vmem [#allocation2], %s191
          %s194 = ssub.s32 128, 128
          %195 = vsyncadd %s189, %s194
          %s196 = smul.addr %s18, 2
          %s197 = smul.addr %s196, 64
          %s198 = scalar_lea.hbm %s0, %s197
          %s200 = sshll.u32 %s192, 4
          %s201 = int_to_ptr.vmem [resolvable:$true] %s200
          %203 = dma.hbm_to_vmem [thread:$0]  %s198, 128, %s201, %s189
        $region32: #{tpu_custom_call.1} parent=27 // pred_fallthru
          _
      $region28: #{tpu_custom_call.1} parent=5 // pred_fallthru
        _
      %p204 = scmp.le.s32.totalorder 1, %s18
      %p205 = scmp.lt.s32.totalorder %s18, 3
      %p206 = pnand %p204, %p205
      %p207 = pneg %p206
      // Predicated region
      $region33: #{tpu_custom_call.1} parent=5 // pred_check
        _
      $region34: #{tpu_custom_call.1} parent=5 // pred_check_branch
        %209 = sbr.rel (%p206) target = $region36
      $region35: #{tpu_custom_call.1} parent=5 // pred_region
        %s210 = ssub.s32 %s18, 1
        %s211 = sand.u32 %s31, 1
        %s212 = scalar_lea.sflag [#allocation3], %s211
        %s213 = sand.u32 %s31, 1
        %s214 = smul.addr %s213, 8
        %s215 = scalar_lea.vmem [#allocation2], %s214
        // Predicated region
        $region37: #{tpu_custom_call.1} parent=35 // pred_check
          %p216 = pneg %p44
        $region38: #{tpu_custom_call.1} parent=35 // pred_check_branch
          %218 = sbr.rel (%p216) target = $region40
        $region39: #{tpu_custom_call.1} parent=35 // pred_region
          %219 = dma.done %s212, 128
        $region40: #{tpu_custom_call.1} parent=35 // pred_fallthru
          _
        // Predicated region
        $region41: #{tpu_custom_call.1} parent=35 // pred_check
          %p220 = pneg %p65
        $region42: #{tpu_custom_call.1} parent=35 // pred_check_branch
          %222 = sbr.rel (%p220) target = $region44
        $region43: #{tpu_custom_call.1} parent=35 // pred_region
          %223 = dma.done [#allocation6], 64
        $region44: #{tpu_custom_call.1} parent=35 // pred_fallthru
          _
        // Predicated region
        $region45: #{tpu_custom_call.1} parent=35 // pred_check
          %p224 = pneg %p86
        $region46: #{tpu_custom_call.1} parent=35 // pred_check_branch
          %226 = sbr.rel (%p224) target = $region48
        $region47: #{tpu_custom_call.1} parent=35 // pred_region
          %227 = dma.done [#allocation6], 64
        $region48: #{tpu_custom_call.1} parent=35 // pred_fallthru
          _
        // Predicated region
        $region49: #{tpu_custom_call.1} parent=35 // pred_check
          %p228 = pneg %p107
        $region50: #{tpu_custom_call.1} parent=35 // pred_check_branch
          %230 = sbr.rel (%p228) target = $region52
        $region51: #{tpu_custom_call.1} parent=35 // pred_region
          %231 = dma.done [#allocation9], 32
        $region52: #{tpu_custom_call.1} parent=35 // pred_fallthru
          _
        %s232 = sand.u32 %s31, 1
        %s233 = scalar_lea.sflag [#allocation3], %s232
        %s234 = sand.u32 %s31, 1
        %s235 = smul.addr %s234, 8
        %s236 = scalar_lea.vmem [#allocation2], %s235
        %p237 = pneg %p44
        %p238 = pneg %p41
        %p239 = pneg %p65
        %p240 = pneg %p62
        %p241 = pneg %p86
        %p242 = pneg %p83
        %p243 = pneg %p107
        %p244 = pneg %p104
        %p245 = pneg %p133
        %p246 = pneg %p130
        %s247 = sand.u32 %s120, 1
        %s248 = scalar_lea.sflag [#allocation4], %s247
        %s249 = sand.u32 %s120, 1
        %s250 = smul.addr %s249, 8
        %s251 = scalar_lea.vmem [#allocation10], %s250
        %v252 = vld [vmem:[%s215] sm:$0xff]
        %v253 = vld [vmem:[#allocation8] sm:$0x3]
        %vm254 = vcmp.eq.s32.totalorder %v253, 0
        %v255 = vsel %vm254, 1, 0
        %v256 = vlaneseq
        %v257 = vshrl.u32 %v256, 7
        %v258 = vsub.s32 0, %v257
        %v259 = vrot.slane %v255, %v258
        %v260 = vlaneseq
        %v261 = vshrl.u32 %v260, 7
        %v262 = vsub.s32 1, %v261
        %v263 = vrot.slane %v255, %v262
        %vm264 = vcmp.eq.s32.totalorder %v259, 1
        %vm265 = vcmp.eq.s32.totalorder %v263, 1
        %vm266 = vcmp.eq.s32.totalorder %v253, 15
        %v267 = vsel %vm266, 1, 0
        %v268 = vlaneseq
        %v269 = vshrl.u32 %v268, 7
        %v270 = vsub.s32 0, %v269
        %v271 = vrot.slane %v267, %v270
        %v272 = vlaneseq
        %v273 = vshrl.u32 %v272, 7
        %v274 = vsub.s32 1, %v273
        %v275 = vrot.slane %v267, %v274
        %vm276 = vcmp.eq.s32.totalorder %v271, 1
        %vm277 = vcmp.eq.s32.totalorder %v275, 1
        %v279 = vcombine.high %v252, %v252
        %280 = vrot.lane.b32.xlu0 %v252, 127
        %v281 = vpop.permute.xlu0 %280
        %282 = vrot.lane.b32.xlu0 %v279, 127
        %v283 = vpop.permute.xlu0 %282
        %vm284 = vcmask 1039360
        %v285 = vsel %vm284, %v281, %v283
        %v289 = vsel %vm284, %v283, %v281
        %290 = vrot.lane.b32.xlu0 %v279, 1
        %v291 = vpop.permute.xlu0 %290
        %293 = vrot.lane.b32.xlu0 %v252, 1
        %v294 = vpop.permute.xlu0 %293
        %vm295 = vcmask 7168
        %v296 = vsel %vm295, %v294, %v291
        %v299 = vsel %vm295, %v291, %v294
        %v300 = vsel %vm264, %v285, %v299
        %v301 = vsel %vm265, %v289, %v296
        %v302 = vsel %vm276, %v299, %v285
        %v303 = vsel %vm277, %v296, %v289
        %305 = vrot.lane.b32.xlu0 %v300, 112
        %v306 = vpop.permute.xlu0 %305
        %309 = vrot.lane.b32.xlu0 %v300, 16
        %v310 = vpop.permute.xlu0 %309
        %311 = vrot.lane.b32.xlu0 %v301, 16
        %v312 = vpop.permute.xlu0 %311
        %vm313 = vcmask 130048
        %v314 = vsel %vm313, %v310, %v312
        %v317 = vsel %vm313, %v306, %v310
        %318 = vrot.lane.b32.xlu0 %v252, 112
        %v319 = vpop.permute.xlu0 %318
        %321 = vrot.lane.b32.xlu0 %v252, 16
        %v322 = vpop.permute.xlu0 %321
        %323 = vrot.lane.b32.xlu0 %v279, 16
        %v324 = vpop.permute.xlu0 %323
        %v325 = vsel %vm313, %v322, %v324
        %v327 = vsel %vm313, %v319, %v322
        %329 = vrot.lane.b32.xlu0 %v302, 112
        %v330 = vpop.permute.xlu0 %329
        %333 = vrot.lane.b32.xlu0 %v302, 16
        %v334 = vpop.permute.xlu0 %333
        %335 = vrot.lane.b32.xlu0 %v303, 16
        %v336 = vpop.permute.xlu0 %335
        %v337 = vsel %vm313, %v334, %v336
        %v340 = vsel %vm313, %v330, %v334
        %341 = vrot.lane.b32.xlu0 %v301, 112
        %v342 = vpop.permute.xlu0 %341
        %vm343 = vcmask 916480
        %v344 = vsel %vm343, %v306, %v342
        %v348 = vsel %vm343, %v342, %v312
        %349 = vrot.lane.b32.xlu0 %v279, 112
        %v350 = vpop.permute.xlu0 %349
        %v351 = vsel %vm343, %v319, %v350
        %v354 = vsel %vm343, %v350, %v324
        %355 = vrot.lane.b32.xlu0 %v303, 112
        %v356 = vpop.permute.xlu0 %355
        %v357 = vsel %vm343, %v330, %v356
        %v361 = vsel %vm343, %v356, %v336
        %v363 = vrot.slane %v327, 4
        %v364 = vrot.slane %v325, 4
        %v367 = vrot.slane %v300, 4
        %v368 = vrot.slane %v301, 4
        %v372 = vrot.slane %v302, 4
        %v373 = vrot.slane %v303, 4
        %v377 = vrot.slane %v351, 4
        %v378 = vrot.slane %v354, 4
        %vm381 = vcmask 1043456
        %v382 = vsel %vm381, %v317, %v363
        %v383 = vsel %vm381, %v314, %v364
        %v384 = vsel %vm381, %v340, %v367
        %v385 = vsel %vm381, %v337, %v368
        %v386 = vsel %vm381, %v252, %v372
        %v387 = vsel %vm381, %v279, %v373
        %v388 = vsel %vm381, %v344, %v377
        %v389 = vsel %vm381, %v348, %v378
        %v390 = vsel %vm381, %v357, 1.0
        %v391 = vsel %vm381, %v361, 1.0
        %v392 = vld [vmem:[#allocation5] sm:$0xf]
        %vm393 = vcmask 302080
        %v395 = vsel %vm393, %v392, 0
        %vm397 = vcmask 1044480
        %v399 = vsel %vm397, %v390, 0
        %v402 = vsel %vm397, %v391, 0
        %404 = vmatprep.subr.mxu0 %v383
        %405 = vmatpush1.msra.mxu0 %v382
        %406 = vmatprep.subr.mxu0 %v385
        %407 = vmatpush1.msra.mxu0 %v384
        %408 = vmatprep.subr.mxu0 %v387
        %409 = vmatpush1.msra.mxu0 %v386
        %410 = vmatprep.subr.mxu0 %v389
        %411 = vmatpush1.msra.mxu0 %v388
        %412 = vmatprep.subr.mxu0 %v402
        %413 = vmatpush1.msra.mxu0 %v399
        %414 = vmatprep.subr.mxu0 0.0
        %415 = vmatpush1.msra.mxu0 0.0
        %416 = vmatprep.subr.mxu0 0.0
        %417 = vmatpush1.msra.mxu0 0.0
        %418 = vmatprep.subr.mxu0 0.0
        %419 = vmatpush1.msra.mxu0 0.0
        %420 = vmatprep.subr.mxu0 0.0
        %421 = vmatpush1.msra.mxu0 0.0
        %422 = vmatprep.subr.mxu0 0.0
        %423 = vmatpush1.msra.mxu0 0.0
        %424 = vmatprep.subr.mxu0 0.0
        %425 = vmatpush1.msra.mxu0 0.0
        %426 = vmatprep.subr.mxu0 0.0
        %427 = vmatpush1.msra.mxu0 0.0
        %428 = vmatprep.subr.mxu0 0.0
        %429 = vmatpush1.msra.mxu0 0.0
        %430 = vmatprep.subr.mxu0 0.0
        %431 = vmatpush1.msra.mxu0 0.0
        %432 = vmatprep.subr.mxu0 0.0
        %433 = vmatpush1.msra.mxu0 0.0
        %434 = vmatprep.subr.mxu0 0.0
        %435 = vmatpush1.msra.mxu0 0.0
        %436 = vmatprep.subr.mxu0 0.0
        %437 = vmatpush1.msra.mxu0 0.0
        %438 = vmatprep.subr.mxu0 0.0
        %439 = vmatpush1.msra.mxu0 0.0
        %440 = vmatprep.subr.mxu0 0.0
        %441 = vmatpush1.msra.mxu0 0.0
        %442 = vmatprep.subr.mxu0 0.0
        %443 = vmatpush1.msra.mxu0 0.0
        %444 = vmatprep.subr.mxu0 0.0
        %445 = vmatpush1.msra.mxu0 0.0
        %446 = vmatprep.subr.mxu0 0.0
        %447 = vmatpush1.msra.mxu0 0.0
        %448 = vmatprep.subr.mxu0 0.0
        %449 = vmatpush1.msra.mxu0 0.0
        %450 = vmatprep.subr.mxu0 0.0
        %451 = vmatpush1.msra.mxu0 0.0
        %452 = vmatprep.subr.mxu0 0.0
        %453 = vmatpush1.msra.mxu0 0.0
        %454 = vmatprep.subr.mxu0 0.0
        %455 = vmatpush1.msra.mxu0 0.0
        %456 = vmatprep.subr.mxu0 0.0
        %457 = vmatpush1.msra.mxu0 0.0
        %458 = vmatprep.subr.mxu0 0.0
        %459 = vmatpush1.msra.mxu0 0.0
        %460 = vmatprep.subr.mxu0 0.0
        %461 = vmatpush1.msra.mxu0 0.0
        %462 = vmatprep.subr.mxu0 0.0
        %463 = vmatpush1.msra.mxu0 0.0
        %464 = vmatprep.subr.mxu0 0.0
        %465 = vmatpush1.msra.mxu0 0.0
        %466 = vmatprep.subr.mxu0 0.0
        %467 = vmatpush1.msra.mxu0 0.0
        %468 = vmatprep.mubr.f32.mxu0 0.0
        %469 = vmatmul.mubr.f32.gmra.mrb[0].mxu0 %v395
        %v470 = vpop.f32.mrb[0].mxu0
        %v471 = vadd.f32 0.0, %v470
        %v472 = vpop.f32.mrb[0].mxu0
        %v473 = vadd.f32 0.0, %v472
        %474 = vdwg.mxu0
        %v475 = vsel %vm381, %v471, 0.0
        %v476 = vsel %vm381, %v473, 0.0
        %v477 = vadd.f32 %v475, %v476
        %478 = vadd.xlane.f32.xlu0 %v477
        %v479 = vpop.xlane.xlu0 %478
        %v480 = vmul.f32 %v471, %v471
        %v481 = vmul.f32 %v473, %v473
        %v482 = vsel %vm381, %v480, 0.0
        %v483 = vsel %vm381, %v481, 0.0
        %v484 = vadd.f32 %v482, %v483
        %485 = vadd.xlane.f32.xlu0 %v484
        %v486 = vpop.xlane.xlu0 %485
        %v487 = vmul.f32 %v479, 0.00390625
        %v488 = vmul.f32 %v486, 0.00390625
        %v489 = vmul.f32 %v487, %v487
        %v490 = vsub.f32 %v488, %v489
        %v491 = vmax.f32 %v490, 0.0
        %v492 = vsub.f32 %v471, %v487
        %v493 = vsub.f32 %v473, %v487
        %v494 = vadd.f32 %v491, 1e-05
        %v495 = vrsqrt.pop %v494
        %v496 = vmul.f32 %v492, %v495
        %v497 = vmul.f32 %v493, %v495
        %v498 = vmax.f32 %v496, 0.0
        %v499 = vmax.f32 %v497, 0.0
        %502 = vrot.lane.b32.xlu0 %v498, 127
        %v503 = vpop.permute.xlu0 %502
        %504 = vrot.lane.b32.xlu0 %v499, 127
        %v505 = vpop.permute.xlu0 %504
        %v506 = vsel %vm284, %v503, %v505
        %v510 = vsel %vm284, %v505, %v503
        %511 = vrot.lane.b32.xlu0 %v499, 1
        %v512 = vpop.permute.xlu0 %511
        %514 = vrot.lane.b32.xlu0 %v498, 1
        %v515 = vpop.permute.xlu0 %514
        %v516 = vsel %vm295, %v515, %v512
        %v519 = vsel %vm295, %v512, %v515
        %v520 = vsel %vm264, %v506, %v519
        %v521 = vsel %vm265, %v510, %v516
        %v522 = vsel %vm276, %v519, %v506
        %v523 = vsel %vm277, %v516, %v510
        %525 = vrot.lane.b32.xlu0 %v520, 112
        %v526 = vpop.permute.xlu0 %525
        %529 = vrot.lane.b32.xlu0 %v520, 16
        %v530 = vpop.permute.xlu0 %529
        %531 = vrot.lane.b32.xlu0 %v521, 16
        %v532 = vpop.permute.xlu0 %531
        %v533 = vsel %vm313, %v530, %v532
        %v536 = vsel %vm313, %v526, %v530
        %537 = vrot.lane.b32.xlu0 %v498, 112
        %v538 = vpop.permute.xlu0 %537
        %540 = vrot.lane.b32.xlu0 %v498, 16
        %v541 = vpop.permute.xlu0 %540
        %542 = vrot.lane.b32.xlu0 %v499, 16
        %v543 = vpop.permute.xlu0 %542
        %v544 = vsel %vm313, %v541, %v543
        %v546 = vsel %vm313, %v538, %v541
        %548 = vrot.lane.b32.xlu0 %v522, 112
        %v549 = vpop.permute.xlu0 %548
        %552 = vrot.lane.b32.xlu0 %v522, 16
        %v553 = vpop.permute.xlu0 %552
        %554 = vrot.lane.b32.xlu0 %v523, 16
        %v555 = vpop.permute.xlu0 %554
        %v556 = vsel %vm313, %v553, %v555
        %v559 = vsel %vm313, %v549, %v553
        %560 = vrot.lane.b32.xlu0 %v521, 112
        %v561 = vpop.permute.xlu0 %560
        %v562 = vsel %vm343, %v526, %v561
        %v566 = vsel %vm343, %v561, %v532
        %567 = vrot.lane.b32.xlu0 %v499, 112
        %v568 = vpop.permute.xlu0 %567
        %v569 = vsel %vm343, %v538, %v568
        %v572 = vsel %vm343, %v568, %v543
        %573 = vrot.lane.b32.xlu0 %v523, 112
        %v574 = vpop.permute.xlu0 %573
        %v575 = vsel %vm343, %v549, %v574
        %v579 = vsel %vm343, %v574, %v555
        %v581 = vrot.slane %v546, 4
        %v582 = vrot.slane %v544, 4
        %v585 = vrot.slane %v520, 4
        %v586 = vrot.slane %v521, 4
        %v589 = vrot.slane %v522, 4
        %v590 = vrot.slane %v523, 4
        %v594 = vrot.slane %v569, 4
        %v595 = vrot.slane %v572, 4
        %v598 = vsel %vm381, %v536, %v581
        %v599 = vsel %vm381, %v533, %v582
        %v600 = vsel %vm381, %v559, %v585
        %v601 = vsel %vm381, %v556, %v586
        %v602 = vsel %vm381, %v498, %v589
        %v603 = vsel %vm381, %v499, %v590
        %v604 = vsel %vm381, %v562, %v594
        %v605 = vsel %vm381, %v566, %v595
        %v606 = vsel %vm381, %v575, 1.0
        %v607 = vsel %vm381, %v579, 1.0
        %v608 = vld [vmem:[#allocation7] sm:$0xf]
        %v610 = vsel %vm393, %v608, 0
        %v613 = vsel %vm397, %v606, 0
        %v616 = vsel %vm397, %v607, 0
        %618 = vmatprep.subr.mxu0 %v599
        %619 = vmatpush1.msra.mxu0 %v598
        %620 = vmatprep.subr.mxu0 %v601
        %621 = vmatpush1.msra.mxu0 %v600
        %622 = vmatprep.subr.mxu0 %v603
        %623 = vmatpush1.msra.mxu0 %v602
        %624 = vmatprep.subr.mxu0 %v605
        %625 = vmatpush1.msra.mxu0 %v604
        %626 = vmatprep.subr.mxu0 %v616
        %627 = vmatpush1.msra.mxu0 %v613
        %628 = vmatprep.subr.mxu0 0.0
        %629 = vmatpush1.msra.mxu0 0.0
        %630 = vmatprep.subr.mxu0 0.0
        %631 = vmatpush1.msra.mxu0 0.0
        %632 = vmatprep.subr.mxu0 0.0
        %633 = vmatpush1.msra.mxu0 0.0
        %634 = vmatprep.subr.mxu0 0.0
        %635 = vmatpush1.msra.mxu0 0.0
        %636 = vmatprep.subr.mxu0 0.0
        %637 = vmatpush1.msra.mxu0 0.0
        %638 = vmatprep.subr.mxu0 0.0
        %639 = vmatpush1.msra.mxu0 0.0
        %640 = vmatprep.subr.mxu0 0.0
        %641 = vmatpush1.msra.mxu0 0.0
        %642 = vmatprep.subr.mxu0 0.0
        %643 = vmatpush1.msra.mxu0 0.0
        %644 = vmatprep.subr.mxu0 0.0
        %645 = vmatpush1.msra.mxu0 0.0
        %646 = vmatprep.subr.mxu0 0.0
        %647 = vmatpush1.msra.mxu0 0.0
        %648 = vmatprep.subr.mxu0 0.0
        %649 = vmatpush1.msra.mxu0 0.0
        %650 = vmatprep.subr.mxu0 0.0
        %651 = vmatpush1.msra.mxu0 0.0
        %652 = vmatprep.subr.mxu0 0.0
        %653 = vmatpush1.msra.mxu0 0.0
        %654 = vmatprep.subr.mxu0 0.0
        %655 = vmatpush1.msra.mxu0 0.0
        %656 = vmatprep.subr.mxu0 0.0
        %657 = vmatpush1.msra.mxu0 0.0
        %658 = vmatprep.subr.mxu0 0.0
        %659 = vmatpush1.msra.mxu0 0.0
        %660 = vmatprep.subr.mxu0 0.0
        %661 = vmatpush1.msra.mxu0 0.0
        %662 = vmatprep.subr.mxu0 0.0
        %663 = vmatpush1.msra.mxu0 0.0
        %664 = vmatprep.subr.mxu0 0.0
        %665 = vmatpush1.msra.mxu0 0.0
        %666 = vmatprep.subr.mxu0 0.0
        %667 = vmatpush1.msra.mxu0 0.0
        %668 = vmatprep.subr.mxu0 0.0
        %669 = vmatpush1.msra.mxu0 0.0
        %670 = vmatprep.subr.mxu0 0.0
        %671 = vmatpush1.msra.mxu0 0.0
        %672 = vmatprep.subr.mxu0 0.0
        %673 = vmatpush1.msra.mxu0 0.0
        %674 = vmatprep.subr.mxu0 0.0
        %675 = vmatpush1.msra.mxu0 0.0
        %676 = vmatprep.subr.mxu0 0.0
        %677 = vmatpush1.msra.mxu0 0.0
        %678 = vmatprep.subr.mxu0 0.0
        %679 = vmatpush1.msra.mxu0 0.0
        %680 = vmatprep.subr.mxu0 0.0
        %681 = vmatpush1.msra.mxu0 0.0
        %682 = vmatprep.mubr.f32.mxu0 0.0
        %683 = vmatmul.mubr.f32.gmra.mrb[0].mxu0 %v610
        %v684 = vpop.f32.mrb[0].mxu0
        %v685 = vadd.f32 0.0, %v684
        %v686 = vpop.f32.mrb[0].mxu0
        %v687 = vadd.f32 0.0, %v686
        %688 = vdwg.mxu0
        %v689 = vsel %vm381, %v685, 0.0
        %v690 = vsel %vm381, %v687, 0.0
        %v691 = vadd.f32 %v689, %v690
        %692 = vadd.xlane.f32.xlu0 %v691
        %v693 = vpop.xlane.xlu0 %692
        %v694 = vmul.f32 %v685, %v685
        %v695 = vmul.f32 %v687, %v687
        %v696 = vsel %vm381, %v694, 0.0
        %v697 = vsel %vm381, %v695, 0.0
        %v698 = vadd.f32 %v696, %v697
        %699 = vadd.xlane.f32.xlu0 %v698
        %v700 = vpop.xlane.xlu0 %699
        %v701 = vmul.f32 %v693, 0.00390625
        %v702 = vmul.f32 %v700, 0.00390625
        %v703 = vmul.f32 %v701, %v701
        %v704 = vsub.f32 %v702, %v703
        %v705 = vmax.f32 %v704, 0.0
        %v706 = vsub.f32 %v685, %v701
        %v707 = vsub.f32 %v687, %v701
        %v708 = vadd.f32 %v705, 1e-05
        %v709 = vrsqrt.pop %v708
        %v710 = vmul.f32 %v706, %v709
        %v711 = vmul.f32 %v707, %v709
        %v714 = vcombine.low %v710, %v711
        %v716 = vadd.f32 %v252, %v714
        %717 = vst [vmem:[%s251] sm:$0xff] %v716
        %s718 = sand.u32 %s120, 1
        %s719 = scalar_lea.sflag [#allocation4], %s718
        %s720 = sand.u32 %s120, 1
        %s721 = smul.addr %s720, 8
        %s722 = scalar_lea.vmem [#allocation10], %s721
        // Predicated region
        $region53: #{tpu_custom_call.1} parent=35 // pred_check
          %p723 = pneg %p130
        $region54: #{tpu_custom_call.1} parent=35 // pred_check_branch
          %725 = sbr.rel (%p723) target = $region56
        $region55: #{tpu_custom_call.1} parent=35 // pred_region
          %s727 = ssub.s32 128, 128
          %728 = vsyncadd %s719, %s727
          %s729 = smul.addr %s23, 2
          %s730 = smul.addr %s729, 64
          %s731 = scalar_lea.hbm %s4, %s730
          %s733 = sshll.u32 %s722, 4
          %s734 = int_to_ptr.vmem [resolvable:$true] %s733
          %736 = dma.vmem_to_hbm [thread:$0]  %s734, 128, %s731, %s719
        $region56: #{tpu_custom_call.1} parent=35 // pred_fallthru
          _
      $region36: #{tpu_custom_call.1} parent=5 // pred_fallthru
        _
      %p737 = scmp.le.s32.totalorder 2, %s18
      // Predicated region
      $region57: #{tpu_custom_call.1} parent=5 // pred_check
        %p738 = pneg %p737
      $region58: #{tpu_custom_call.1} parent=5 // pred_check_branch
        %740 = sbr.rel (%p738) target = $region60
      $region59: #{tpu_custom_call.1} parent=5 // pred_region
        %s741 = ssub.s32 %s18, 2
        // Predicated region
        $region61: #{tpu_custom_call.1} parent=59 // pred_check
          %p742 = pneg %p136
        $region62: #{tpu_custom_call.1} parent=59 // pred_check_branch
          %744 = sbr.rel (%p742) target = $region64
        $region63: #{tpu_custom_call.1} parent=59 // pred_region
          %s745 = sand.u32 %s121, 1
          %s746 = scalar_lea.sflag [#allocation4], %s745
          %s747 = sand.u32 %s121, 1
          %s748 = smul.addr %s747, 8
          %s749 = scalar_lea.vmem [#allocation10], %s748
          %750 = dma.done %s746, 128
        $region64: #{tpu_custom_call.1} parent=59 // pred_fallthru
          _
      $region60: #{tpu_custom_call.1} parent=5 // pred_fallthru
        _
    $region6: #{tpu_custom_call.1} parent=1 // loop_footer
      %s22 = sadd.s32 1, %s18
    $region7: #{tpu_custom_call.1} parent=1 // loop_footer_branch
      %17 = sbr.rel target = $region3
    $region8: #{tpu_custom_call.1} parent=1 // loop_exit
      _
    %751 = vsyncpa [#allocation3], 1
    %s752 = scalar_lea.sflag [#allocation3], 1
    %753 = vsyncpa %s752, 1
    %754 = vsyncpa [#allocation6], 1
    %755 = vsyncpa [#allocation9], 1
    %756 = vsyncpa [#allocation4], 1
    %s757 = scalar_lea.sflag [#allocation4], 1
    %758 = vsyncpa %s757, 1

</llo_original>
